<compile_context>
chip_gen: v5e
topology: v5e:2x2
jax: 0.10.0
libtpu: 0.0.40
codegen_flags: <defaults>
</compile_context>

<pallas_src>
import functools

import jax
import jax.numpy as jnp
import numpy as np
from jax.experimental import pallas as pl
from jax.experimental.pallas import tpu as pltpu


# ----------------------------------------------------------------------------- utils
def _ceil_to(x: int, m: int) -> int:
    return ((x + m - 1) // m) * m


def _pick_divisor_tile(total: int, target: int, align: int = 128):
    """Largest multiple of `align` that divides `total` and is <= target, else None."""
    t = (min(target, total) // align) * align
    while t >= align:
        if total % t == 0:
            return t
        t -= align
    return None


def _tile_and_pad(total: int, target: int, align: int = 128):
    """Choose a lane-aligned tile and (possibly padded) extent for one tiled axis."""
    if total <= target:
        return total, total                      # single full-dim block, any size OK
    tile = _pick_divisor_tile(total, target, align)
    if tile is not None:
        return tile, total
    tile = max(align, (target // align) * align)
    return tile, _ceil_to(total, tile)


def _batch_tile(B: int, target: int = 256):
    """Batch tile: full dim if small (no padding), else multiple-of-8 divisor, else pad."""
    if B <= target:
        return B, B
    bm = (target // 8) * 8
    while bm >= 8:
        if B % bm == 0:
            return bm, B
        bm -= 8
    bm = (target // 8) * 8
    return bm, _ceil_to(B, bm)


def _pad2d(a, rows, cols):
    r, c = a.shape
    if r == rows and c == cols:
        return a
    return jnp.pad(a, ((0, rows - r), (0, cols - c)))


# --------------------------------------------------------------------------- kernels
def _encoder_kernel(x_ref, *rest, scale, precision, has_mask):
    """h = relu(scale * sum_k (x*mask)[:, k] @ We^T[k, :] + (user_emb + b_enc)).

    grid = (batch_tiles, k_tiles); k is the reduction axis ("arbitrary", innermost).
      x_ref    : (bm, tk)  input interactions chunk (f32 or bf16)
      mask_ref : (bm, tk)  bf16 0/1 keep mask chunk          [only if has_mask]
      we_ref   : (tk, H)   encoder weight chunk, transposed (bf16 or f32)
      ue_ref   : (bm, H)   f32 user-embedding rows + encoder bias (pre-folded)
      h_ref    : (bm, H)   output encoder activation (bf16 or f32)
      acc_ref  : (bm, H)   f32 VMEM accumulator
    """
    if has_mask:
        mask_ref, we_ref, ue_ref, h_ref, acc_ref = rest
    else:
        we_ref, ue_ref, h_ref, acc_ref = rest
        mask_ref = None

    k = pl.program_id(1)              # top level only (safe in interpret mode)
    nk = pl.num_programs(1)

    @pl.when(k == 0)
    def _init():
        acc_ref[...] = jnp.zeros_like(acc_ref)

    x = x_ref[...].astype(jnp.float32)
    if mask_ref is not None:
        # mask math in f32 (v5e has no bf16 VPU); 1/(1-p) scale is applied on the
        # (bm, H) accumulator below, not on the (bm, tk) elementwise path.
        x = x * mask_ref[...].astype(jnp.float32)

    acc_ref[...] += jnp.dot(x.astype(we_ref.dtype), we_ref[...],
                            preferred_element_type=jnp.float32,
                            precision=precision)

    @pl.when(k == nk - 1)
    def _finalize():
        h = acc_ref[...]
        if scale != 1.0:
            h = h * jnp.float32(scale)
        h = h + ue_ref[...]
        h_ref[...] = jnp.maximum(h, 0.0).astype(h_ref.dtype)


def _decoder_kernel(h_ref, wd_ref, bd_ref, out_ref, *, precision):
    """out_tile = h @ Wd^T[:, tile] + b_dec[tile].

    grid = (batch_tiles, item_tiles); both "parallel".
      h_ref   : (bm, H)   encoder activation (bf16 or f32)
      wd_ref  : (H, tn)   decoder weight tile, transposed (bf16 or f32)
      bd_ref  : (1, tn)   f32 decoder bias tile
      out_ref : (bm, tn)  output tile (lane-dense stores)
    """
    out = jnp.dot(h_ref[...], wd_ref[...],
                  preferred_element_type=jnp.float32, precision=precision)
    out_ref[...] = (out + bd_ref[...]).astype(out_ref.dtype)


# --------------------------------------------------------------------------- wrapper
def prepare_cdae_weights(w_enc, w_dec, b_dec, *, use_bf16=True, tk=2048, tn=1024):
    """One-time weight prep (hoist out of the per-step forward path and cache).

    w_enc: (H, I), w_dec: (I, H), b_dec: (I,)  (PyTorch Linear layouts).
    Transposes, casts to bf16 (optional) and pads the item axis to tile multiples.
    """
    H, I = w_enc.shape
    assert w_dec.shape == (I, H) and b_dec.shape == (I,)
    w_dtype = jnp.bfloat16 if use_bf16 else jnp.float32

    tk_eff, Ik = _tile_and_pad(I, tk)      # encoder reduction (K) axis
    tn_eff, Ip = _tile_and_pad(I, tn)      # decoder output (N) axis

    we_t = w_enc.T.astype(w_dtype)                         # (I, H)
    if Ik != I:
        we_t = jnp.pad(we_t, ((0, Ik - I), (0, 0)))        # zero rows -> no-op in matmul
    wd_t = w_dec.T.astype(w_dtype)                         # (H, I)
    bd = b_dec.astype(jnp.float32).reshape(1, I)
    if Ip != I:
        wd_t = jnp.pad(wd_t, ((0, 0), (0, Ip - I)))
        bd = jnp.pad(bd, ((0, 0), (0, Ip - I)))

    return dict(we_t=we_t, wd_t=wd_t, bd=bd,
                tk=tk_eff, Ik=Ik, tn=tn_eff, Ip=Ip,
                num_items=I, hidden=H, use_bf16=use_bf16)


def cdae_forward(x, user_emb_rows, b_enc, params, *,
                 corruption_ratio=0.0, apply_dropout=False,
                 rng_key=None, dropout_mask=None,
                 bm=256, out_dtype=jnp.float32,
                 vmem_limit_bytes=64 * 1024 * 1024):
    """CDAE forward.

    x             : (B, I) implicit-feedback matrix (f32; bf16 also accepted — it is
                    exact for 0/1 data and halves the largest HBM read stream).
    user_emb_rows : (B, H) gathered user embeddings (Embedding lookup is JAX glue).
    b_enc         : (H,)   encoder bias.
    params        : dict from prepare_cdae_weights (cache it across calls).
    apply_dropout : training-mode corruption.  Keep-mask comes from `dropout_mask`
                    (bool/0-1 array (B, I)) if given, else from `rng_key`.
    """
    B, I = x.shape
    H = params["hidden"]
    assert I == params["num_items"]
    assert user_emb_rows.shape == (B, H) and b_enc.shape == (H,)
    p = float(corruption_ratio)
    assert 0.0 <= p < 1.0

    tk, Ik = params["tk"], params["Ik"]
    tn, Ip = params["tn"], params["Ip"]
    use_bf16 = params["use_bf16"]
    h_dtype = jnp.bfloat16 if use_bf16 else jnp.float32
    precision = None if use_bf16 else jax.lax.Precision.HIGHEST

    # ---- dropout keep-mask (wrapper-side RNG; applied in-kernel) ----
    has_mask = bool(apply_dropout) and p > 0.0
    if has_mask:
        if dropout_mask is None:
            if rng_key is None:
                raise ValueError("apply_dropout=True with corruption_ratio>0 needs "
                                 "rng_key or dropout_mask")
            dropout_mask = jax.random.bernoulli(rng_key, 1.0 - p, (B, I))
        mask = dropout_mask.astype(jnp.bfloat16)           # compact 0/1 stream
        scale = 1.0 / (1.0 - p)
    else:
        mask = None
        scale = 1.0

    # ---- batch tiling (no pad when B fits in one tile) ----
    bm_eff, Bp = _batch_tile(B, bm)
    nbi = Bp // bm_eff

    # ---- per-call activation prep (all (B, H)-sized or required zero-padding) ----
    uemb_be = (user_emb_rows + b_enc[None, :]).astype(jnp.float32)   # fold encoder bias
    x_in = _pad2d(x, Bp, Ik)                                         # zeros: no-op in matmul
    uemb_be = _pad2d(uemb_be, Bp, H)
    if has_mask:
        mask = _pad2d(mask, Bp, Ik)

    # ---------------- encoder: h = relu(dropout(x) @ We^T + b_enc + uemb) ----------------
    nk = Ik // tk
    enc_in_specs = [pl.BlockSpec((bm_eff, tk), lambda i, k: (i, k))]            # x
    enc_inputs = [x_in]
    if has_mask:
        enc_in_specs.append(pl.BlockSpec((bm_eff, tk), lambda i, k: (i, k)))    # mask
        enc_inputs.append(mask)
    enc_in_specs += [
        pl.BlockSpec((tk, H), lambda i, k: (k, 0)),                              # We^T chunk
        pl.BlockSpec((bm_eff, H), lambda i, k: (i, 0)),                          # uemb + b_enc
    ]
    enc_inputs += [params["we_t"], uemb_be]

    h = pl.pallas_call(
        functools.partial(_encoder_kernel, scale=float(scale),
                          precision=precision, has_mask=has_mask),
        out_shape=jax.ShapeDtypeStruct((Bp, H), h_dtype),
        grid_spec=pltpu.PrefetchScalarGridSpec(
            num_scalar_prefetch=0,
            grid=(nbi, nk),
            in_specs=enc_in_specs,
            out_specs=pl.BlockSpec((bm_eff, H), lambda i, k: (i, 0)),
            scratch_shapes=[pltpu.VMEM((bm_eff, H), jnp.float32)],
        ),
        compiler_params=pltpu.CompilerParams(
            dimension_semantics=("parallel", "arbitrary"),
            vmem_limit_bytes=vmem_limit_bytes),
    )(*enc_inputs)

    # ---------------- decoder: out = h @ Wd^T + b_dec ----------------
    nj = Ip // tn
    out = pl.pallas_call(
        functools.partial(_decoder_kernel, precision=precision),
        out_shape=jax.ShapeDtypeStruct((Bp, Ip), out_dtype),
        grid_spec=pltpu.PrefetchScalarGridSpec(
            num_scalar_prefetch=0,
            grid=(nbi, nj),
            in_specs=[
                pl.BlockSpec((bm_eff, H), lambda i, j: (i, 0)),   # h
                pl.BlockSpec((H, tn), lambda i, j: (0, j)),       # Wd^T tile
                pl.BlockSpec((1, tn), lambda i, j: (0, j)),       # decoder bias tile
            ],
            out_specs=pl.BlockSpec((bm_eff, tn), lambda i, j: (i, j)),
        ),
        compiler_params=pltpu.CompilerParams(
            dimension_semantics=("parallel", "parallel"),
            vmem_limit_bytes=vmem_limit_bytes),
    )(h, params["wd_t"], params["bd"])

    if Bp != B or Ip != I:
        out = out[:B, :I]
    return out


# ------------------------------------------------------------------------------ demo
def _xavier_normal(key, shape):
    fan_out, fan_in = shape
    std = float(np.sqrt(2.0 / (fan_in + fan_out)))
    return std * jax.random.normal(key, shape, dtype=jnp.float32)


if __name__ == "__main__":
    # Small synthetic configuration consistent with the module's __init__.
    num_users, num_items, hidden_dim = 16, 256, 32
    corruption_ratio = 0.25
    B = 16  # batch of users

    key = jax.random.PRNGKey(0)
    k_emb, k_we, k_be, k_wd, k_bd, k_x, k_uid, k_mask = jax.random.split(key, 8)

    user_embedding = _xavier_normal(k_emb, (num_users, hidden_dim))      # (U, H)
    w_enc = _xavier_normal(k_we, (hidden_dim, num_items))                # (H, I)
    b_enc = 0.01 * jax.random.normal(k_be, (hidden_dim,), jnp.float32)   # (H,)
    w_dec = _xavier_normal(k_wd, (num_items, hidden_dim))                # (I, H)
    b_dec = 0.01 * jax.random.normal(k_bd, (num_items,), jnp.float32)    # (I,)

    x = (jax.random.uniform(k_x, (B, num_items)) < 0.1).astype(jnp.float32)
    user_idx = jax.random.randint(k_uid, (B,), 0, num_users)
    # Embedding gather is glue (plain JAX); the hot path runs inside the kernels.
    user_emb_rows = user_embedding[user_idx]                             # (B, H)

    # Pure-JAX references.
    ref_eval = (jnp.maximum(x @ w_enc.T + b_enc + user_emb_rows, 0.0) @ w_dec.T + b_dec)

    # 1) f32 weights, eval mode (no dropout): exact parity.
    params_f32 = prepare_cdae_weights(w_enc, w_dec, b_dec, use_bf16=False)
    out_eval = cdae_forward(x, user_emb_rows, b_enc, params_f32, apply_dropout=False)
    out_eval = jax.block_until_ready(out_eval)
    np.testing.assert_allclose(np.asarray(out_eval), np.asarray(ref_eval),
                               rtol=1e-4, atol=1e-5)

    # 2) f32 weights, training mode with an externally supplied keep-mask:
    #    checks the full dropout path against the reference with the same mask.
    keep = jax.random.bernoulli(k_mask, 1.0 - corruption_ratio, (B, num_items))
    x_corr = jnp.where(keep, x, 0.0) * (1.0 / (1.0 - corruption_ratio))
    ref_drop = (jnp.maximum(x_corr @ w_enc.T + b_enc + user_emb_rows, 0.0) @ w_dec.T + b_dec)
    out_drop = cdae_forward(x, user_emb_rows, b_enc, params_f32,
                            corruption_ratio=corruption_ratio,
                            apply_dropout=True, dropout_mask=keep)
    out_drop = jax.block_until_ready(out_drop)
    np.testing.assert_allclose(np.asarray(out_drop), np.asarray(ref_drop),
                               rtol=1e-4, atol=1e-5)

    # 3) bf16 matmul operands (f32 accumulate), eval mode -> loose tolerance vs f32 ref.
    params_bf16 = prepare_cdae_weights(w_enc, w_dec, b_dec, use_bf16=True)
    out_bf16 = cdae_forward(x, user_emb_rows, b_enc, params_bf16, apply_dropout=False)
    out_bf16 = jax.block_until_ready(out_bf16)
    np.testing.assert_allclose(np.asarray(out_bf16), np.asarray(ref_eval),
                               rtol=2e-2, atol=2e-2)

    # 4) Full training-mode forward: wrapper-RNG dropout mask + bf16 matmuls.
    out_train = cdae_forward(x, user_emb_rows, b_enc, params_bf16,
                             corruption_ratio=corruption_ratio,
                             apply_dropout=True, rng_key=jax.random.PRNGKey(123))
    out_train = jax.block_until_ready(out_train)
    assert out_train.shape == (B, num_items)
    assert bool(jnp.all(jnp.isfinite(out_train)))

    print("KERNEL_OK")
</pallas_src>

<mosaic_0001>
module attributes {stable_mosaic.version = 11 : i64} {
  func.func @_encoder_kernel(%arg0: i32, %arg1: i32, %arg2: memref<16x256xf32, #tpu.memory_space<vmem>>, %arg3: memref<256x32xf32, #tpu.memory_space<vmem>>, %arg4: memref<16x32xf32, #tpu.memory_space<vmem>>, %arg5: memref<16x32xf32, #tpu.memory_space<vmem>>, %arg6: memref<16x32xf32, #tpu.memory_space<vmem>>) attributes {dimension_semantics = [#tpu.dimension_semantics<parallel>, #tpu.dimension_semantics<arbitrary>], iteration_bounds = array<i64: 1, 1>, scalar_prefetch = 0 : i64, scratch_operands = 1 : i64, tpu.core_type = #tpu.core_type<tc>, window_params = [{transform_indices = @transform_0, window_bounds = array<i64: 16, 256>}, {transform_indices = @transform_1, window_bounds = array<i64: 256, 32>}, {transform_indices = @transform_2, window_bounds = array<i64: 16, 32>}, {transform_indices = @transform_3, window_bounds = array<i64: 16, 32>}]} {
    %c0_i32 = arith.constant 0 : i32
    %0 = arith.cmpi eq, %arg1, %c0_i32 : i32
    %1 = arith.extui %0 : i1 to i32
    %c0_i32_0 = arith.constant 0 : i32
    %2 = arith.cmpi ne, %1, %c0_i32_0 : i32
    scf.if %2 {
      %cst_10 = arith.constant 0.000000e+00 : f32
      %12 = vector.broadcast %cst_10 : f32 to vector<16x32xf32>
      %c0_11 = arith.constant 0 : index
      %c0_12 = arith.constant 0 : index
      %13 = vector.load %arg6[%c0_11, %c0_12] : memref<16x32xf32, #tpu.memory_space<vmem>>, vector<16x32xf32>
      tpu.vector_store %arg6[%c0_11, %c0_12], %12 {strides = array<i32>} : memref<16x32xf32, #tpu.memory_space<vmem>>, vector<16x32xf32>,
    } else {
    }
    %c0 = arith.constant 0 : index
    %c0_1 = arith.constant 0 : index
    %3 = vector.load %arg2[%c0, %c0_1] : memref<16x256xf32, #tpu.memory_space<vmem>>, vector<16x256xf32>
    %c0_2 = arith.constant 0 : index
    %c0_3 = arith.constant 0 : index
    %4 = vector.load %arg6[%c0_2, %c0_3] : memref<16x32xf32, #tpu.memory_space<vmem>>, vector<16x32xf32>
    %c0_4 = arith.constant 0 : index
    %c0_5 = arith.constant 0 : index
    %5 = vector.load %arg3[%c0_4, %c0_5] : memref<256x32xf32, #tpu.memory_space<vmem>>, vector<256x32xf32>
    %cst = arith.constant dense<0.000000e+00> : vector<16x32xf32>
    %6 = tpu.matmul %3, %5, %cst {dimension_numbers = #tpu.dot_dimension_numbers<[1], [0], [0], [1], [0, 0, 1, 1], [], []>, precision = #tpu.contract_precision<fp32>} : vector<16x256xf32>, vector<256x32xf32>, vector<16x32xf32> -> vector<16x32xf32>
    %7 = arith.addf %4, %6 : vector<16x32xf32>
    %c0_6 = arith.constant 0 : index
    %c0_7 = arith.constant 0 : index
    %8 = vector.load %arg6[%c0_6, %c0_7] : memref<16x32xf32, #tpu.memory_space<vmem>>, vector<16x32xf32>
    tpu.vector_store %arg6[%c0_6, %c0_7], %7 {strides = array<i32>} : memref<16x32xf32, #tpu.memory_space<vmem>>, vector<16x32xf32>,
    %c0_i32_8 = arith.constant 0 : i32
    %9 = arith.cmpi eq, %arg1, %c0_i32_8 : i32
    %10 = arith.extui %9 : i1 to i32
    %c0_i32_9 = arith.constant 0 : i32
    %11 = arith.cmpi ne, %10, %c0_i32_9 : i32
    scf.if %11 {
      %c0_10 = arith.constant 0 : index
      %c0_11 = arith.constant 0 : index
      %12 = vector.load %arg6[%c0_10, %c0_11] : memref<16x32xf32, #tpu.memory_space<vmem>>, vector<16x32xf32>
      %c0_12 = arith.constant 0 : index
      %c0_13 = arith.constant 0 : index
      %13 = vector.load %arg4[%c0_12, %c0_13] : memref<16x32xf32, #tpu.memory_space<vmem>>, vector<16x32xf32>
      %14 = arith.addf %12, %13 : vector<16x32xf32>
      %cst_14 = arith.constant 0.000000e+00 : f32
      %15 = vector.broadcast %cst_14 : f32 to vector<16x32xf32>
      %16 = arith.maximumf %14, %15 : vector<16x32xf32>
      %c0_15 = arith.constant 0 : index
      %c0_16 = arith.constant 0 : index
      %17 = vector.load %arg5[%c0_15, %c0_16] : memref<16x32xf32, #tpu.memory_space<vmem>>, vector<16x32xf32>
      tpu.vector_store %arg5[%c0_15, %c0_16], %16 {strides = array<i32>} : memref<16x32xf32, #tpu.memory_space<vmem>>, vector<16x32xf32>,
    } else {
    }
    return
  }
  func.func @transform_0(%arg0: i32, %arg1: i32) -> (i32, i32) {
    %c0_i32 = arith.constant 0 : i32
    return %arg0, %arg1 : i32, i32
  }
  func.func @transform_1(%arg0: i32, %arg1: i32) -> (i32, i32) {
    %c0_i32 = arith.constant 0 : i32
    %c0_i32_0 = arith.constant 0 : i32
    return %arg1, %c0_i32 : i32, i32
  }
  func.func @transform_2(%arg0: i32, %arg1: i32) -> (i32, i32) {
    %c0_i32 = arith.constant 0 : i32
    %c0_i32_0 = arith.constant 0 : i32
    return %arg0, %c0_i32 : i32, i32
  }
  func.func @transform_3(%arg0: i32, %arg1: i32) -> (i32, i32) {
    %c0_i32 = arith.constant 0 : i32
    %c0_i32_0 = arith.constant 0 : i32
    return %arg0, %c0_i32 : i32, i32
  }
}

</mosaic_0001>

<llo_original>
// kernel: tpu_custom_call.1
$region0: #{tpu_custom_call.1}
  #allocation0 [shape = 'u32[]', space=smem, size = 0x4, offset = 0x4, fixed_abs, tag = 'smem constant byte address 0x4 - core index']
  #allocation1 [shape = 'u32[72,128]{1,0:T(1,128)}', space=vmem, size = 0x9000, scoped, tag = 'internal scratch']
  #allocation2 [shape = 'f32[16,32]{1,0:T(8,128)}', space=vmem, size = 0x2000, scoped, tag = 'scratch operand']
  %s0 = inlined_call_operand.vmem [shape: f32[16,256], index: 0, kind: input, shape index: {}]
  %s1 = inlined_call_operand.vmem [shape: f32[256,32], index: 1, kind: input, shape index: {}]
  %s2 = inlined_call_operand.vmem [shape: f32[16,32], index: 2, kind: input, shape index: {}]
  %s3 = inlined_call_operand.hbm [shape: f32[16,32], index: 3, kind: output, shape index: {}]
  %s4 = sld [smem:[#allocation0]]
  $region30: #{tpu_custom_call.1} parent=0
    _
  %s6 = ssub.s32 1, %s4
  %s7 = scalar_select 0, %s6, %s4
  $region1: #{tpu_custom_call.1} parent=0
    #allocation3 [shape = 'u8[8192]{0}', space=vmem, size = 0x2000, scoped, tag = 'output window, operand 0, single buffered']
    #allocation4 [shape = 's32[1]{0}', space=sflag, size = 0x4, scoped, tag = 'scoped memory for tpu_custom_call.1']
    %8 = vsyncpa [#allocation4], 0
    // Predicated region
    $region2: #{tpu_custom_call.1} parent=1 // pred_check
      _
    $region3: #{tpu_custom_call.1} parent=1 // pred_check_branch
      %10 = sbr.rel (0) target = $region5
    $region4: #{tpu_custom_call.1} parent=1 // pred_region
      _
    $region5: #{tpu_custom_call.1} parent=1 // pred_fallthru
      _
    // Predicated region
    $region6: #{tpu_custom_call.1} parent=1 // pred_check
      _
    $region7: #{tpu_custom_call.1} parent=1 // pred_check_branch
      %12 = sbr.rel (0) target = $region9
    $region8: #{tpu_custom_call.1} parent=1 // pred_region
      _
    $region9: #{tpu_custom_call.1} parent=1 // pred_fallthru
      _
    // Predicated region
    $region10: #{tpu_custom_call.1} parent=1 // pred_check
      _
    $region11: #{tpu_custom_call.1} parent=1 // pred_check_branch
      %14 = sbr.rel (0) target = $region13
    $region12: #{tpu_custom_call.1} parent=1 // pred_region
      _
    $region13: #{tpu_custom_call.1} parent=1 // pred_fallthru
      _
    %p15 = scmp.eq.s32.totalorder 0, 0
    // Predicated region
    $region14: #{tpu_custom_call.1} parent=1 // pred_check
      %p16 = pneg %p15
    $region15: #{tpu_custom_call.1} parent=1 // pred_check_branch
      %18 = sbr.rel (%p16) target = $region17
    $region16: #{tpu_custom_call.1} parent=1 // pred_region
      %vm19 = vcmask 261120
      %20 = vst.msk [vmem:[#allocation2] sm:$0xff] %vm19, 0.0
      %21 = vst.msk [vmem:[#allocation2 + $0x8] sm:$0xff] %vm19, 0.0
    $region17: #{tpu_custom_call.1} parent=1 // pred_fallthru
      _
    %v22 = vld [vmem:[%s0] sm:$0xff]
    %v23 = vld [vmem:[%s0 + $0x8] sm:$0xff]
    %v24 = vld [vmem:[%s0 + $0x10] sm:$0xff]
    %v25 = vld [vmem:[%s0 + $0x18] sm:$0xff]
    %v26 = vld [vmem:[#allocation2] sm:$0xff]
    %v27 = vld [vmem:[#allocation2 + $0x8] sm:$0xff]
    %v28 = vld [vmem:[%s1] sm:$0xff]
    %v29 = vld [vmem:[%s1 + $0x8] sm:$0xff]
    %v30 = vld [vmem:[%s1 + $0x10] sm:$0xff]
    %v31 = vld [vmem:[%s1 + $0x18] sm:$0xff]
    %v32 = vld [vmem:[%s1 + $0x20] sm:$0xff]
    %v33 = vld [vmem:[%s1 + $0x28] sm:$0xff]
    %v34 = vld [vmem:[%s1 + $0x30] sm:$0xff]
    %v35 = vld [vmem:[%s1 + $0x38] sm:$0xff]
    %v36 = vld [vmem:[%s1 + $0x40] sm:$0xff]
    %v37 = vld [vmem:[%s1 + $0x48] sm:$0xff]
    %v38 = vld [vmem:[%s1 + $0x50] sm:$0xff]
    %v39 = vld [vmem:[%s1 + $0x58] sm:$0xff]
    %v40 = vld [vmem:[%s1 + $0x60] sm:$0xff]
    %v41 = vld [vmem:[%s1 + $0x68] sm:$0xff]
    %v42 = vld [vmem:[%s1 + $0x70] sm:$0xff]
    %v43 = vld [vmem:[%s1 + $0x78] sm:$0xff]
    %v44 = vld [vmem:[%s1 + $0x80] sm:$0xff]
    %v45 = vld [vmem:[%s1 + $0x88] sm:$0xff]
    %v46 = vld [vmem:[%s1 + $0x90] sm:$0xff]
    %v47 = vld [vmem:[%s1 + $0x98] sm:$0xff]
    %v48 = vld [vmem:[%s1 + $0xa0] sm:$0xff]
    %v49 = vld [vmem:[%s1 + $0xa8] sm:$0xff]
    %v50 = vld [vmem:[%s1 + $0xb0] sm:$0xff]
    %v51 = vld [vmem:[%s1 + $0xb8] sm:$0xff]
    %v52 = vld [vmem:[%s1 + $0xc0] sm:$0xff]
    %v53 = vld [vmem:[%s1 + $0xc8] sm:$0xff]
    %v54 = vld [vmem:[%s1 + $0xd0] sm:$0xff]
    %v55 = vld [vmem:[%s1 + $0xd8] sm:$0xff]
    %v56 = vld [vmem:[%s1 + $0xe0] sm:$0xff]
    %v57 = vld [vmem:[%s1 + $0xe8] sm:$0xff]
    %v58 = vld [vmem:[%s1 + $0xf0] sm:$0xff]
    %v59 = vld [vmem:[%s1 + $0xf8] sm:$0xff]
    %v60 = vand.u32 %v43, 4294901760
    %61 = vmatpush.msra.mxu0 %v60
    %v62 = vand.u32 %v42, 4294901760
    %63 = vmatpush.msra.mxu0 %v62
    %v64 = vand.u32 %v41, 4294901760
    %65 = vmatpush.msra.mxu0 %v64
    %v66 = vand.u32 %v40, 4294901760
    %67 = vmatpush.msra.mxu0 %v66
    %v68 = vand.u32 %v39, 4294901760
    %69 = vmatpush.msra.mxu0 %v68
    %v70 = vand.u32 %v38, 4294901760
    %71 = vmatpush.msra.mxu0 %v70
    %v72 = vand.u32 %v37, 4294901760
    %73 = vmatpush.msra.mxu0 %v72
    %v74 = vand.u32 %v36, 4294901760
    %75 = vmatpush.msra.mxu0 %v74
    %v76 = vand.u32 %v35, 4294901760
    %77 = vmatpush.msra.mxu0 %v76
    %v78 = vand.u32 %v34, 4294901760
    %79 = vmatpush.msra.mxu0 %v78
    %v80 = vand.u32 %v33, 4294901760
    %81 = vmatpush.msra.mxu0 %v80
    %v82 = vand.u32 %v32, 4294901760
    %83 = vmatpush.msra.mxu0 %v82
    %v84 = vand.u32 %v31, 4294901760
    %85 = vmatpush.msra.mxu0 %v84
    %v86 = vand.u32 %v30, 4294901760
    %87 = vmatpush.msra.mxu0 %v86
    %v88 = vand.u32 %v29, 4294901760
    %89 = vmatpush.msra.mxu0 %v88
    %v90 = vand.u32 %v28, 4294901760
    %91 = vmatpush.msra.mxu0 %v90
    %v92 = vand.u32 %v22, 4294901760
    %v93 = vsub.f32 %v22, %v92
    %v94 = vand.u32 %v93, 4294901760
    %v95 = vsub.f32 %v93, %v94
    %v96 = vand.u32 %v95, 4294901760
    %97 = vmatmul.f32.gmra.mxu0 %v96
    %v98 = vpop.f32.mrf.mxu0
    %v99 = vadd.f32 0.0, %v98
    %v100 = vand.u32 %v24, 4294901760
    %v101 = vsub.f32 %v24, %v100
    %v102 = vand.u32 %v101, 4294901760
    %v103 = vsub.f32 %v101, %v102
    %v104 = vand.u32 %v103, 4294901760
    %105 = vmatmul.f32.gmra.mxu0 %v104
    %v106 = vpop.f32.mrf.mxu0
    %v107 = vadd.f32 0.0, %v106
    %108 = vdwg.mxu0
    %v109 = vand.u32 %v43, 4294901760
    %v110 = vsub.f32 %v43, %v109
    %v111 = vand.u32 %v110, 4294901760
    %v112 = vsub.f32 %v110, %v111
    %v113 = vand.u32 %v112, 4294901760
    %114 = vmatpush.msra.mxu0 %v113
    %v115 = vand.u32 %v42, 4294901760
    %v116 = vsub.f32 %v42, %v115
    %v117 = vand.u32 %v116, 4294901760
    %v118 = vsub.f32 %v116, %v117
    %v119 = vand.u32 %v118, 4294901760
    %120 = vmatpush.msra.mxu0 %v119
    %v121 = vand.u32 %v41, 4294901760
    %v122 = vsub.f32 %v41, %v121
    %v123 = vand.u32 %v122, 4294901760
    %v124 = vsub.f32 %v122, %v123
    %v125 = vand.u32 %v124, 4294901760
    %126 = vmatpush.msra.mxu0 %v125
    %v127 = vand.u32 %v40, 4294901760
    %v128 = vsub.f32 %v40, %v127
    %v129 = vand.u32 %v128, 4294901760
    %v130 = vsub.f32 %v128, %v129
    %v131 = vand.u32 %v130, 4294901760
    %132 = vmatpush.msra.mxu0 %v131
    %v133 = vand.u32 %v39, 4294901760
    %v134 = vsub.f32 %v39, %v133
    %v135 = vand.u32 %v134, 4294901760
    %v136 = vsub.f32 %v134, %v135
    %v137 = vand.u32 %v136, 4294901760
    %138 = vmatpush.msra.mxu0 %v137
    %v139 = vand.u32 %v38, 4294901760
    %v140 = vsub.f32 %v38, %v139
    %v141 = vand.u32 %v140, 4294901760
    %v142 = vsub.f32 %v140, %v141
    %v143 = vand.u32 %v142, 4294901760
    %144 = vmatpush.msra.mxu0 %v143
    %v145 = vand.u32 %v37, 4294901760
    %v146 = vsub.f32 %v37, %v145
    %v147 = vand.u32 %v146, 4294901760
    %v148 = vsub.f32 %v146, %v147
    %v149 = vand.u32 %v148, 4294901760
    %150 = vmatpush.msra.mxu0 %v149
    %v151 = vand.u32 %v36, 4294901760
    %v152 = vsub.f32 %v36, %v151
    %v153 = vand.u32 %v152, 4294901760
    %v154 = vsub.f32 %v152, %v153
    %v155 = vand.u32 %v154, 4294901760
    %156 = vmatpush.msra.mxu0 %v155
    %v157 = vand.u32 %v35, 4294901760
    %v158 = vsub.f32 %v35, %v157
    %v159 = vand.u32 %v158, 4294901760
    %v160 = vsub.f32 %v158, %v159
    %v161 = vand.u32 %v160, 4294901760
    %162 = vmatpush.msra.mxu0 %v161
    %v163 = vand.u32 %v34, 4294901760
    %v164 = vsub.f32 %v34, %v163
    %v165 = vand.u32 %v164, 4294901760
    %v166 = vsub.f32 %v164, %v165
    %v167 = vand.u32 %v166, 4294901760
    %168 = vmatpush.msra.mxu0 %v167
    %v169 = vand.u32 %v33, 4294901760
    %v170 = vsub.f32 %v33, %v169
    %v171 = vand.u32 %v170, 4294901760
    %v172 = vsub.f32 %v170, %v171
    %v173 = vand.u32 %v172, 4294901760
    %174 = vmatpush.msra.mxu0 %v173
    %v175 = vand.u32 %v32, 4294901760
    %v176 = vsub.f32 %v32, %v175
    %v177 = vand.u32 %v176, 4294901760
    %v178 = vsub.f32 %v176, %v177
    %v179 = vand.u32 %v178, 4294901760
    %180 = vmatpush.msra.mxu0 %v179
    %v181 = vand.u32 %v31, 4294901760
    %v182 = vsub.f32 %v31, %v181
    %v183 = vand.u32 %v182, 4294901760
    %v184 = vsub.f32 %v182, %v183
    %v185 = vand.u32 %v184, 4294901760
    %186 = vmatpush.msra.mxu0 %v185
    %v187 = vand.u32 %v30, 4294901760
    %v188 = vsub.f32 %v30, %v187
    %v189 = vand.u32 %v188, 4294901760
    %v190 = vsub.f32 %v188, %v189
    %v191 = vand.u32 %v190, 4294901760
    %192 = vmatpush.msra.mxu0 %v191
    %v193 = vand.u32 %v29, 4294901760
    %v194 = vsub.f32 %v29, %v193
    %v195 = vand.u32 %v194, 4294901760
    %v196 = vsub.f32 %v194, %v195
    %v197 = vand.u32 %v196, 4294901760
    %198 = vmatpush.msra.mxu0 %v197
    %v199 = vand.u32 %v28, 4294901760
    %v200 = vsub.f32 %v28, %v199
    %v201 = vand.u32 %v200, 4294901760
    %v202 = vsub.f32 %v200, %v201
    %v203 = vand.u32 %v202, 4294901760
    %204 = vmatpush.msra.mxu0 %v203
    %v205 = vand.u32 %v22, 4294901760
    %206 = vmatmul.f32.gmra.mxu0 %v205
    %v207 = vpop.f32.mrf.mxu0
    %v208 = vadd.f32 %v99, %v207
    %v209 = vand.u32 %v24, 4294901760
    %210 = vmatmul.f32.gmra.mxu0 %v209
    %v211 = vpop.f32.mrf.mxu0
    %v212 = vadd.f32 %v107, %v211
    %213 = vdwg.mxu0
    %v214 = vand.u32 %v43, 4294901760
    %v215 = vsub.f32 %v43, %v214
    %216 = vmatpush.msra.mxu0 %v215
    %v217 = vand.u32 %v42, 4294901760
    %v218 = vsub.f32 %v42, %v217
    %219 = vmatpush.msra.mxu0 %v218
    %v220 = vand.u32 %v41, 4294901760
    %v221 = vsub.f32 %v41, %v220
    %222 = vmatpush.msra.mxu0 %v221
    %v223 = vand.u32 %v40, 4294901760
    %v224 = vsub.f32 %v40, %v223
    %225 = vmatpush.msra.mxu0 %v224
    %v226 = vand.u32 %v39, 4294901760
    %v227 = vsub.f32 %v39, %v226
    %228 = vmatpush.msra.mxu0 %v227
    %v229 = vand.u32 %v38, 4294901760
    %v230 = vsub.f32 %v38, %v229
    %231 = vmatpush.msra.mxu0 %v230
    %v232 = vand.u32 %v37, 4294901760
    %v233 = vsub.f32 %v37, %v232
    %234 = vmatpush.msra.mxu0 %v233
    %v235 = vand.u32 %v36, 4294901760
    %v236 = vsub.f32 %v36, %v235
    %237 = vmatpush.msra.mxu0 %v236
    %v238 = vand.u32 %v35, 4294901760
    %v239 = vsub.f32 %v35, %v238
    %240 = vmatpush.msra.mxu0 %v239
    %v241 = vand.u32 %v34, 4294901760
    %v242 = vsub.f32 %v34, %v241
    %243 = vmatpush.msra.mxu0 %v242
    %v244 = vand.u32 %v33, 4294901760
    %v245 = vsub.f32 %v33, %v244
    %246 = vmatpush.msra.mxu0 %v245
    %v247 = vand.u32 %v32, 4294901760
    %v248 = vsub.f32 %v32, %v247
    %249 = vmatpush.msra.mxu0 %v248
    %v250 = vand.u32 %v31, 4294901760
    %v251 = vsub.f32 %v31, %v250
    %252 = vmatpush.msra.mxu0 %v251
    %v253 = vand.u32 %v30, 4294901760
    %v254 = vsub.f32 %v30, %v253
    %255 = vmatpush.msra.mxu0 %v254
    %v256 = vand.u32 %v29, 4294901760
    %v257 = vsub.f32 %v29, %v256
    %258 = vmatpush.msra.mxu0 %v257
    %v259 = vand.u32 %v28, 4294901760
    %v260 = vsub.f32 %v28, %v259
    %261 = vmatpush.msra.mxu0 %v260
    %v262 = vand.u32 %v22, 4294901760
    %v263 = vsub.f32 %v22, %v262
    %264 = vmatmul.f32.gmra.mxu0 %v263
    %v265 = vpop.f32.mrf.mxu0
    %v266 = vadd.f32 %v208, %v265
    %v267 = vand.u32 %v24, 4294901760
    %v268 = vsub.f32 %v24, %v267
    %269 = vmatmul.f32.gmra.mxu0 %v268
    %v270 = vpop.f32.mrf.mxu0
    %v271 = vadd.f32 %v212, %v270
    %272 = vdwg.mxu0
    %v273 = vand.u32 %v43, 4294901760
    %274 = vmatpush.msra.mxu0 %v273
    %v275 = vand.u32 %v42, 4294901760
    %276 = vmatpush.msra.mxu0 %v275
    %v277 = vand.u32 %v41, 4294901760
    %278 = vmatpush.msra.mxu0 %v277
    %v279 = vand.u32 %v40, 4294901760
    %280 = vmatpush.msra.mxu0 %v279
    %v281 = vand.u32 %v39, 4294901760
    %282 = vmatpush.msra.mxu0 %v281
    %v283 = vand.u32 %v38, 4294901760
    %284 = vmatpush.msra.mxu0 %v283
    %v285 = vand.u32 %v37, 4294901760
    %286 = vmatpush.msra.mxu0 %v285
    %v287 = vand.u32 %v36, 4294901760
    %288 = vmatpush.msra.mxu0 %v287
    %v289 = vand.u32 %v35, 4294901760
    %290 = vmatpush.msra.mxu0 %v289
    %v291 = vand.u32 %v34, 4294901760
    %292 = vmatpush.msra.mxu0 %v291
    %v293 = vand.u32 %v33, 4294901760
    %294 = vmatpush.msra.mxu0 %v293
    %v295 = vand.u32 %v32, 4294901760
    %296 = vmatpush.msra.mxu0 %v295
    %v297 = vand.u32 %v31, 4294901760
    %298 = vmatpush.msra.mxu0 %v297
    %v299 = vand.u32 %v30, 4294901760
    %300 = vmatpush.msra.mxu0 %v299
    %v301 = vand.u32 %v29, 4294901760
    %302 = vmatpush.msra.mxu0 %v301
    %v303 = vand.u32 %v28, 4294901760
    %304 = vmatpush.msra.mxu0 %v303
    %v305 = vand.u32 %v22, 4294901760
    %v306 = vsub.f32 %v22, %v305
    %v307 = vand.u32 %v306, 4294901760
    %308 = vmatmul.f32.gmra.mxu0 %v307
    %v309 = vpop.f32.mrf.mxu0
    %v310 = vadd.f32 %v266, %v309
    %v311 = vand.u32 %v24, 4294901760
    %v312 = vsub.f32 %v24, %v311
    %v313 = vand.u32 %v312, 4294901760
    %314 = vmatmul.f32.gmra.mxu0 %v313
    %v315 = vpop.f32.mrf.mxu0
    %v316 = vadd.f32 %v271, %v315
    %317 = vdwg.mxu0
    %v318 = vand.u32 %v43, 4294901760
    %v319 = vsub.f32 %v43, %v318
    %v320 = vand.u32 %v319, 4294901760
    %321 = vmatpush.msra.mxu0 %v320
    %v322 = vand.u32 %v42, 4294901760
    %v323 = vsub.f32 %v42, %v322
    %v324 = vand.u32 %v323, 4294901760
    %325 = vmatpush.msra.mxu0 %v324
    %v326 = vand.u32 %v41, 4294901760
    %v327 = vsub.f32 %v41, %v326
    %v328 = vand.u32 %v327, 4294901760
    %329 = vmatpush.msra.mxu0 %v328
    %v330 = vand.u32 %v40, 4294901760
    %v331 = vsub.f32 %v40, %v330
    %v332 = vand.u32 %v331, 4294901760
    %333 = vmatpush.msra.mxu0 %v332
    %v334 = vand.u32 %v39, 4294901760
    %v335 = vsub.f32 %v39, %v334
    %v336 = vand.u32 %v335, 4294901760
    %337 = vmatpush.msra.mxu0 %v336
    %v338 = vand.u32 %v38, 4294901760
    %v339 = vsub.f32 %v38, %v338
    %v340 = vand.u32 %v339, 4294901760
    %341 = vmatpush.msra.mxu0 %v340
    %v342 = vand.u32 %v37, 4294901760
    %v343 = vsub.f32 %v37, %v342
    %v344 = vand.u32 %v343, 4294901760
    %345 = vmatpush.msra.mxu0 %v344
    %v346 = vand.u32 %v36, 4294901760
    %v347 = vsub.f32 %v36, %v346
    %v348 = vand.u32 %v347, 4294901760
    %349 = vmatpush.msra.mxu0 %v348
    %v350 = vand.u32 %v35, 4294901760
    %v351 = vsub.f32 %v35, %v350
    %v352 = vand.u32 %v351, 4294901760
    %353 = vmatpush.msra.mxu0 %v352
    %v354 = vand.u32 %v34, 4294901760
    %v355 = vsub.f32 %v34, %v354
    %v356 = vand.u32 %v355, 4294901760
    %357 = vmatpush.msra.mxu0 %v356
    %v358 = vand.u32 %v33, 4294901760
    %v359 = vsub.f32 %v33, %v358
    %v360 = vand.u32 %v359, 4294901760
    %361 = vmatpush.msra.mxu0 %v360
    %v362 = vand.u32 %v32, 4294901760
    %v363 = vsub.f32 %v32, %v362
    %v364 = vand.u32 %v363, 4294901760
    %365 = vmatpush.msra.mxu0 %v364
    %v366 = vand.u32 %v31, 4294901760
    %v367 = vsub.f32 %v31, %v366
    %v368 = vand.u32 %v367, 4294901760
    %369 = vmatpush.msra.mxu0 %v368
    %v370 = vand.u32 %v30, 4294901760
    %v371 = vsub.f32 %v30, %v370
    %v372 = vand.u32 %v371, 4294901760
    %373 = vmatpush.msra.mxu0 %v372
    %v374 = vand.u32 %v29, 4294901760
    %v375 = vsub.f32 %v29, %v374
    %v376 = vand.u32 %v375, 4294901760
    %377 = vmatpush.msra.mxu0 %v376
    %v378 = vand.u32 %v28, 4294901760
    %v379 = vsub.f32 %v28, %v378
    %v380 = vand.u32 %v379, 4294901760
    %381 = vmatpush.msra.mxu0 %v380
    %v382 = vand.u32 %v22, 4294901760
    %383 = vmatmul.f32.gmra.mxu0 %v382
    %v384 = vpop.f32.mrf.mxu0
    %v385 = vadd.f32 %v310, %v384
    %v386 = vand.u32 %v24, 4294901760
    %387 = vmatmul.f32.gmra.mxu0 %v386
    %v388 = vpop.f32.mrf.mxu0
    %v389 = vadd.f32 %v316, %v388
    %390 = vdwg.mxu0
    %v391 = vand.u32 %v43, 4294901760
    %392 = vmatpush.msra.mxu0 %v391
    %v393 = vand.u32 %v42, 4294901760
    %394 = vmatpush.msra.mxu0 %v393
    %v395 = vand.u32 %v41, 4294901760
    %396 = vmatpush.msra.mxu0 %v395
    %v397 = vand.u32 %v40, 4294901760
    %398 = vmatpush.msra.mxu0 %v397
    %v399 = vand.u32 %v39, 4294901760
    %400 = vmatpush.msra.mxu0 %v399
    %v401 = vand.u32 %v38, 4294901760
    %402 = vmatpush.msra.mxu0 %v401
    %v403 = vand.u32 %v37, 4294901760
    %404 = vmatpush.msra.mxu0 %v403
    %v405 = vand.u32 %v36, 4294901760
    %406 = vmatpush.msra.mxu0 %v405
    %v407 = vand.u32 %v35, 4294901760
    %408 = vmatpush.msra.mxu0 %v407
    %v409 = vand.u32 %v34, 4294901760
    %410 = vmatpush.msra.mxu0 %v409
    %v411 = vand.u32 %v33, 4294901760
    %412 = vmatpush.msra.mxu0 %v411
    %v413 = vand.u32 %v32, 4294901760
    %414 = vmatpush.msra.mxu0 %v413
    %v415 = vand.u32 %v31, 4294901760
    %416 = vmatpush.msra.mxu0 %v415
    %v417 = vand.u32 %v30, 4294901760
    %418 = vmatpush.msra.mxu0 %v417
    %v419 = vand.u32 %v29, 4294901760
    %420 = vmatpush.msra.mxu0 %v419
    %v421 = vand.u32 %v28, 4294901760
    %422 = vmatpush.msra.mxu0 %v421
    %v423 = vand.u32 %v22, 4294901760
    %424 = vmatmul.f32.gmra.mxu0 %v423
    %v425 = vpop.f32.mrf.mxu0
    %v426 = vadd.f32 %v385, %v425
    %v427 = vand.u32 %v24, 4294901760
    %428 = vmatmul.f32.gmra.mxu0 %v427
    %v429 = vpop.f32.mrf.mxu0
    %v430 = vadd.f32 %v389, %v429
    %431 = vdwg.mxu0
    %v432 = vand.u32 %v59, 4294901760
    %433 = vmatpush.msra.mxu0 %v432
    %v434 = vand.u32 %v58, 4294901760
    %435 = vmatpush.msra.mxu0 %v434
    %v436 = vand.u32 %v57, 4294901760
    %437 = vmatpush.msra.mxu0 %v436
    %v438 = vand.u32 %v56, 4294901760
    %439 = vmatpush.msra.mxu0 %v438
    %v440 = vand.u32 %v55, 4294901760
    %441 = vmatpush.msra.mxu0 %v440
    %v442 = vand.u32 %v54, 4294901760
    %443 = vmatpush.msra.mxu0 %v442
    %v444 = vand.u32 %v53, 4294901760
    %445 = vmatpush.msra.mxu0 %v444
    %v446 = vand.u32 %v52, 4294901760
    %447 = vmatpush.msra.mxu0 %v446
    %v448 = vand.u32 %v51, 4294901760
    %449 = vmatpush.msra.mxu0 %v448
    %v450 = vand.u32 %v50, 4294901760
    %451 = vmatpush.msra.mxu0 %v450
    %v452 = vand.u32 %v49, 4294901760
    %453 = vmatpush.msra.mxu0 %v452
    %v454 = vand.u32 %v48, 4294901760
    %455 = vmatpush.msra.mxu0 %v454
    %v456 = vand.u32 %v47, 4294901760
    %457 = vmatpush.msra.mxu0 %v456
    %v458 = vand.u32 %v46, 4294901760
    %459 = vmatpush.msra.mxu0 %v458
    %v460 = vand.u32 %v45, 4294901760
    %461 = vmatpush.msra.mxu0 %v460
    %v462 = vand.u32 %v44, 4294901760
    %463 = vmatpush.msra.mxu0 %v462
    %v464 = vand.u32 %v23, 4294901760
    %v465 = vsub.f32 %v23, %v464
    %v466 = vand.u32 %v465, 4294901760
    %v467 = vsub.f32 %v465, %v466
    %v468 = vand.u32 %v467, 4294901760
    %469 = vmatmul.f32.gmra.mxu0 %v468
    %v470 = vpop.f32.mrf.mxu0
    %v471 = vadd.f32 %v426, %v470
    %v472 = vand.u32 %v25, 4294901760
    %v473 = vsub.f32 %v25, %v472
    %v474 = vand.u32 %v473, 4294901760
    %v475 = vsub.f32 %v473, %v474
    %v476 = vand.u32 %v475, 4294901760
    %477 = vmatmul.f32.gmra.mxu0 %v476
    %v478 = vpop.f32.mrf.mxu0
    %v479 = vadd.f32 %v430, %v478
    %480 = vdwg.mxu0
    %v481 = vand.u32 %v59, 4294901760
    %v482 = vsub.f32 %v59, %v481
    %v483 = vand.u32 %v482, 4294901760
    %v484 = vsub.f32 %v482, %v483
    %v485 = vand.u32 %v484, 4294901760
    %486 = vmatpush.msra.mxu0 %v485
    %v487 = vand.u32 %v58, 4294901760
    %v488 = vsub.f32 %v58, %v487
    %v489 = vand.u32 %v488, 4294901760
    %v490 = vsub.f32 %v488, %v489
    %v491 = vand.u32 %v490, 4294901760
    %492 = vmatpush.msra.mxu0 %v491
    %v493 = vand.u32 %v57, 4294901760
    %v494 = vsub.f32 %v57, %v493
    %v495 = vand.u32 %v494, 4294901760
    %v496 = vsub.f32 %v494, %v495
    %v497 = vand.u32 %v496, 4294901760
    %498 = vmatpush.msra.mxu0 %v497
    %v499 = vand.u32 %v56, 4294901760
    %v500 = vsub.f32 %v56, %v499
    %v501 = vand.u32 %v500, 4294901760
    %v502 = vsub.f32 %v500, %v501
    %v503 = vand.u32 %v502, 4294901760
    %504 = vmatpush.msra.mxu0 %v503
    %v505 = vand.u32 %v55, 4294901760
    %v506 = vsub.f32 %v55, %v505
    %v507 = vand.u32 %v506, 4294901760
    %v508 = vsub.f32 %v506, %v507
    %v509 = vand.u32 %v508, 4294901760
    %510 = vmatpush.msra.mxu0 %v509
    %v511 = vand.u32 %v54, 4294901760
    %v512 = vsub.f32 %v54, %v511
    %v513 = vand.u32 %v512, 4294901760
    %v514 = vsub.f32 %v512, %v513
    %v515 = vand.u32 %v514, 4294901760
    %516 = vmatpush.msra.mxu0 %v515
    %v517 = vand.u32 %v53, 4294901760
    %v518 = vsub.f32 %v53, %v517
    %v519 = vand.u32 %v518, 4294901760
    %v520 = vsub.f32 %v518, %v519
    %v521 = vand.u32 %v520, 4294901760
    %522 = vmatpush.msra.mxu0 %v521
    %v523 = vand.u32 %v52, 4294901760
    %v524 = vsub.f32 %v52, %v523
    %v525 = vand.u32 %v524, 4294901760
    %v526 = vsub.f32 %v524, %v525
    %v527 = vand.u32 %v526, 4294901760
    %528 = vmatpush.msra.mxu0 %v527
    %v529 = vand.u32 %v51, 4294901760
    %v530 = vsub.f32 %v51, %v529
    %v531 = vand.u32 %v530, 4294901760
    %v532 = vsub.f32 %v530, %v531
    %v533 = vand.u32 %v532, 4294901760
    %534 = vmatpush.msra.mxu0 %v533
    %v535 = vand.u32 %v50, 4294901760
    %v536 = vsub.f32 %v50, %v535
    %v537 = vand.u32 %v536, 4294901760
    %v538 = vsub.f32 %v536, %v537
    %v539 = vand.u32 %v538, 4294901760
    %540 = vmatpush.msra.mxu0 %v539
    %v541 = vand.u32 %v49, 4294901760
    %v542 = vsub.f32 %v49, %v541
    %v543 = vand.u32 %v542, 4294901760
    %v544 = vsub.f32 %v542, %v543
    %v545 = vand.u32 %v544, 4294901760
    %546 = vmatpush.msra.mxu0 %v545
    %v547 = vand.u32 %v48, 4294901760
    %v548 = vsub.f32 %v48, %v547
    %v549 = vand.u32 %v548, 4294901760
    %v550 = vsub.f32 %v548, %v549
    %v551 = vand.u32 %v550, 4294901760
    %552 = vmatpush.msra.mxu0 %v551
    %v553 = vand.u32 %v47, 4294901760
    %v554 = vsub.f32 %v47, %v553
    %v555 = vand.u32 %v554, 4294901760
    %v556 = vsub.f32 %v554, %v555
    %v557 = vand.u32 %v556, 4294901760
    %558 = vmatpush.msra.mxu0 %v557
    %v559 = vand.u32 %v46, 4294901760
    %v560 = vsub.f32 %v46, %v559
    %v561 = vand.u32 %v560, 4294901760
    %v562 = vsub.f32 %v560, %v561
    %v563 = vand.u32 %v562, 4294901760
    %564 = vmatpush.msra.mxu0 %v563
    %v565 = vand.u32 %v45, 4294901760
    %v566 = vsub.f32 %v45, %v565
    %v567 = vand.u32 %v566, 4294901760
    %v568 = vsub.f32 %v566, %v567
    %v569 = vand.u32 %v568, 4294901760
    %570 = vmatpush.msra.mxu0 %v569
    %v571 = vand.u32 %v44, 4294901760
    %v572 = vsub.f32 %v44, %v571
    %v573 = vand.u32 %v572, 4294901760
    %v574 = vsub.f32 %v572, %v573
    %v575 = vand.u32 %v574, 4294901760
    %576 = vmatpush.msra.mxu0 %v575
    %v577 = vand.u32 %v23, 4294901760
    %578 = vmatmul.f32.gmra.mxu0 %v577
    %v579 = vpop.f32.mrf.mxu0
    %v580 = vadd.f32 %v471, %v579
    %v581 = vand.u32 %v25, 4294901760
    %582 = vmatmul.f32.gmra.mxu0 %v581
    %v583 = vpop.f32.mrf.mxu0
    %v584 = vadd.f32 %v479, %v583
    %585 = vdwg.mxu0
    %v586 = vand.u32 %v59, 4294901760
    %v587 = vsub.f32 %v59, %v586
    %588 = vmatpush.msra.mxu0 %v587
    %v589 = vand.u32 %v58, 4294901760
    %v590 = vsub.f32 %v58, %v589
    %591 = vmatpush.msra.mxu0 %v590
    %v592 = vand.u32 %v57, 4294901760
    %v593 = vsub.f32 %v57, %v592
    %594 = vmatpush.msra.mxu0 %v593
    %v595 = vand.u32 %v56, 4294901760
    %v596 = vsub.f32 %v56, %v595
    %597 = vmatpush.msra.mxu0 %v596
    %v598 = vand.u32 %v55, 4294901760
    %v599 = vsub.f32 %v55, %v598
    %600 = vmatpush.msra.mxu0 %v599
    %v601 = vand.u32 %v54, 4294901760
    %v602 = vsub.f32 %v54, %v601
    %603 = vmatpush.msra.mxu0 %v602
    %v604 = vand.u32 %v53, 4294901760
    %v605 = vsub.f32 %v53, %v604
    %606 = vmatpush.msra.mxu0 %v605
    %v607 = vand.u32 %v52, 4294901760
    %v608 = vsub.f32 %v52, %v607
    %609 = vmatpush.msra.mxu0 %v608
    %v610 = vand.u32 %v51, 4294901760
    %v611 = vsub.f32 %v51, %v610
    %612 = vmatpush.msra.mxu0 %v611
    %v613 = vand.u32 %v50, 4294901760
    %v614 = vsub.f32 %v50, %v613
    %615 = vmatpush.msra.mxu0 %v614
    %v616 = vand.u32 %v49, 4294901760
    %v617 = vsub.f32 %v49, %v616
    %618 = vmatpush.msra.mxu0 %v617
    %v619 = vand.u32 %v48, 4294901760
    %v620 = vsub.f32 %v48, %v619
    %621 = vmatpush.msra.mxu0 %v620
    %v622 = vand.u32 %v47, 4294901760
    %v623 = vsub.f32 %v47, %v622
    %624 = vmatpush.msra.mxu0 %v623
    %v625 = vand.u32 %v46, 4294901760
    %v626 = vsub.f32 %v46, %v625
    %627 = vmatpush.msra.mxu0 %v626
    %v628 = vand.u32 %v45, 4294901760
    %v629 = vsub.f32 %v45, %v628
    %630 = vmatpush.msra.mxu0 %v629
    %v631 = vand.u32 %v44, 4294901760
    %v632 = vsub.f32 %v44, %v631
    %633 = vmatpush.msra.mxu0 %v632
    %v634 = vand.u32 %v23, 4294901760
    %v635 = vsub.f32 %v23, %v634
    %636 = vmatmul.f32.gmra.mxu0 %v635
    %v637 = vpop.f32.mrf.mxu0
    %v638 = vadd.f32 %v580, %v637
    %v639 = vand.u32 %v25, 4294901760
    %v640 = vsub.f32 %v25, %v639
    %641 = vmatmul.f32.gmra.mxu0 %v640
    %v642 = vpop.f32.mrf.mxu0
    %v643 = vadd.f32 %v584, %v642
    %644 = vdwg.mxu0
    %v645 = vand.u32 %v59, 4294901760
    %646 = vmatpush.msra.mxu0 %v645
    %v647 = vand.u32 %v58, 4294901760
    %648 = vmatpush.msra.mxu0 %v647
    %v649 = vand.u32 %v57, 4294901760
    %650 = vmatpush.msra.mxu0 %v649
    %v651 = vand.u32 %v56, 4294901760
    %652 = vmatpush.msra.mxu0 %v651
    %v653 = vand.u32 %v55, 4294901760
    %654 = vmatpush.msra.mxu0 %v653
    %v655 = vand.u32 %v54, 4294901760
    %656 = vmatpush.msra.mxu0 %v655
    %v657 = vand.u32 %v53, 4294901760
    %658 = vmatpush.msra.mxu0 %v657
    %v659 = vand.u32 %v52, 4294901760
    %660 = vmatpush.msra.mxu0 %v659
    %v661 = vand.u32 %v51, 4294901760
    %662 = vmatpush.msra.mxu0 %v661
    %v663 = vand.u32 %v50, 4294901760
    %664 = vmatpush.msra.mxu0 %v663
    %v665 = vand.u32 %v49, 4294901760
    %666 = vmatpush.msra.mxu0 %v665
    %v667 = vand.u32 %v48, 4294901760
    %668 = vmatpush.msra.mxu0 %v667
    %v669 = vand.u32 %v47, 4294901760
    %670 = vmatpush.msra.mxu0 %v669
    %v671 = vand.u32 %v46, 4294901760
    %672 = vmatpush.msra.mxu0 %v671
    %v673 = vand.u32 %v45, 4294901760
    %674 = vmatpush.msra.mxu0 %v673
    %v675 = vand.u32 %v44, 4294901760
    %676 = vmatpush.msra.mxu0 %v675
    %v677 = vand.u32 %v23, 4294901760
    %v678 = vsub.f32 %v23, %v677
    %v679 = vand.u32 %v678, 4294901760
    %680 = vmatmul.f32.gmra.mxu0 %v679
    %v681 = vpop.f32.mrf.mxu0
    %v682 = vadd.f32 %v638, %v681
    %v683 = vand.u32 %v25, 4294901760
    %v684 = vsub.f32 %v25, %v683
    %v685 = vand.u32 %v684, 4294901760
    %686 = vmatmul.f32.gmra.mxu0 %v685
    %v687 = vpop.f32.mrf.mxu0
    %v688 = vadd.f32 %v643, %v687
    %689 = vdwg.mxu0
    %v690 = vand.u32 %v59, 4294901760
    %v691 = vsub.f32 %v59, %v690
    %v692 = vand.u32 %v691, 4294901760
    %693 = vmatpush.msra.mxu0 %v692
    %v694 = vand.u32 %v58, 4294901760
    %v695 = vsub.f32 %v58, %v694
    %v696 = vand.u32 %v695, 4294901760
    %697 = vmatpush.msra.mxu0 %v696
    %v698 = vand.u32 %v57, 4294901760
    %v699 = vsub.f32 %v57, %v698
    %v700 = vand.u32 %v699, 4294901760
    %701 = vmatpush.msra.mxu0 %v700
    %v702 = vand.u32 %v56, 4294901760
    %v703 = vsub.f32 %v56, %v702
    %v704 = vand.u32 %v703, 4294901760
    %705 = vmatpush.msra.mxu0 %v704
    %v706 = vand.u32 %v55, 4294901760
    %v707 = vsub.f32 %v55, %v706
    %v708 = vand.u32 %v707, 4294901760
    %709 = vmatpush.msra.mxu0 %v708
    %v710 = vand.u32 %v54, 4294901760
    %v711 = vsub.f32 %v54, %v710
    %v712 = vand.u32 %v711, 4294901760
    %713 = vmatpush.msra.mxu0 %v712
    %v714 = vand.u32 %v53, 4294901760
    %v715 = vsub.f32 %v53, %v714
    %v716 = vand.u32 %v715, 4294901760
    %717 = vmatpush.msra.mxu0 %v716
    %v718 = vand.u32 %v52, 4294901760
    %v719 = vsub.f32 %v52, %v718
    %v720 = vand.u32 %v719, 4294901760
    %721 = vmatpush.msra.mxu0 %v720
    %v722 = vand.u32 %v51, 4294901760
    %v723 = vsub.f32 %v51, %v722
    %v724 = vand.u32 %v723, 4294901760
    %725 = vmatpush.msra.mxu0 %v724
    %v726 = vand.u32 %v50, 4294901760
    %v727 = vsub.f32 %v50, %v726
    %v728 = vand.u32 %v727, 4294901760
    %729 = vmatpush.msra.mxu0 %v728
    %v730 = vand.u32 %v49, 4294901760
    %v731 = vsub.f32 %v49, %v730
    %v732 = vand.u32 %v731, 4294901760
    %733 = vmatpush.msra.mxu0 %v732
    %v734 = vand.u32 %v48, 4294901760
    %v735 = vsub.f32 %v48, %v734
    %v736 = vand.u32 %v735, 4294901760
    %737 = vmatpush.msra.mxu0 %v736
    %v738 = vand.u32 %v47, 4294901760
    %v739 = vsub.f32 %v47, %v738
    %v740 = vand.u32 %v739, 4294901760
    %741 = vmatpush.msra.mxu0 %v740
    %v742 = vand.u32 %v46, 4294901760
    %v743 = vsub.f32 %v46, %v742
    %v744 = vand.u32 %v743, 4294901760
    %745 = vmatpush.msra.mxu0 %v744
    %v746 = vand.u32 %v45, 4294901760
    %v747 = vsub.f32 %v45, %v746
    %v748 = vand.u32 %v747, 4294901760
    %749 = vmatpush.msra.mxu0 %v748
    %v750 = vand.u32 %v44, 4294901760
    %v751 = vsub.f32 %v44, %v750
    %v752 = vand.u32 %v751, 4294901760
    %753 = vmatpush.msra.mxu0 %v752
    %v754 = vand.u32 %v23, 4294901760
    %755 = vmatmul.f32.gmra.mxu0 %v754
    %v756 = vpop.f32.mrf.mxu0
    %v757 = vadd.f32 %v682, %v756
    %v758 = vand.u32 %v25, 4294901760
    %759 = vmatmul.f32.gmra.mxu0 %v758
    %v760 = vpop.f32.mrf.mxu0
    %v761 = vadd.f32 %v688, %v760
    %762 = vdwg.mxu0
    %v763 = vand.u32 %v59, 4294901760
    %764 = vmatpush.msra.mxu0 %v763
    %v765 = vand.u32 %v58, 4294901760
    %766 = vmatpush.msra.mxu0 %v765
    %v767 = vand.u32 %v57, 4294901760
    %768 = vmatpush.msra.mxu0 %v767
    %v769 = vand.u32 %v56, 4294901760
    %770 = vmatpush.msra.mxu0 %v769
    %v771 = vand.u32 %v55, 4294901760
    %772 = vmatpush.msra.mxu0 %v771
    %v773 = vand.u32 %v54, 4294901760
    %774 = vmatpush.msra.mxu0 %v773
    %v775 = vand.u32 %v53, 4294901760
    %776 = vmatpush.msra.mxu0 %v775
    %v777 = vand.u32 %v52, 4294901760
    %778 = vmatpush.msra.mxu0 %v777
    %v779 = vand.u32 %v51, 4294901760
    %780 = vmatpush.msra.mxu0 %v779
    %v781 = vand.u32 %v50, 4294901760
    %782 = vmatpush.msra.mxu0 %v781
    %v783 = vand.u32 %v49, 4294901760
    %784 = vmatpush.msra.mxu0 %v783
    %v785 = vand.u32 %v48, 4294901760
    %786 = vmatpush.msra.mxu0 %v785
    %v787 = vand.u32 %v47, 4294901760
    %788 = vmatpush.msra.mxu0 %v787
    %v789 = vand.u32 %v46, 4294901760
    %790 = vmatpush.msra.mxu0 %v789
    %v791 = vand.u32 %v45, 4294901760
    %792 = vmatpush.msra.mxu0 %v791
    %v793 = vand.u32 %v44, 4294901760
    %794 = vmatpush.msra.mxu0 %v793
    %v795 = vand.u32 %v23, 4294901760
    %796 = vmatmul.f32.gmra.mxu0 %v795
    %v797 = vpop.f32.mrf.mxu0
    %v798 = vadd.f32 %v757, %v797
    %v799 = vand.u32 %v25, 4294901760
    %800 = vmatmul.f32.gmra.mxu0 %v799
    %v801 = vpop.f32.mrf.mxu0
    %v802 = vadd.f32 %v761, %v801
    %803 = vdwg.mxu0
    %v804 = vadd.f32 %v26, %v798
    %v805 = vadd.f32 %v27, %v802
    %vm806 = vcmask 261120
    %807 = vst.msk [vmem:[#allocation2] sm:$0xff] %vm806, %v804
    %808 = vst.msk [vmem:[#allocation2 + $0x8] sm:$0xff] %vm806, %v805
    // Predicated region
    $region18: #{tpu_custom_call.1} parent=1 // pred_check
      %p809 = pneg %p15
    $region19: #{tpu_custom_call.1} parent=1 // pred_check_branch
      %811 = sbr.rel (%p809) target = $region21
    $region20: #{tpu_custom_call.1} parent=1 // pred_region
      %v812 = vld [vmem:[#allocation2] sm:$0xff]
      %v813 = vld [vmem:[#allocation2 + $0x8] sm:$0xff]
      %v814 = vld [vmem:[%s2] sm:$0xff]
      %v815 = vld [vmem:[%s2 + $0x8] sm:$0xff]
      %v816 = vadd.f32 %v812, %v814
      %v817 = vadd.f32 %v813, %v815
      %v818 = vmax.f32 %v816, 0.0
      %v819 = vmax.f32 %v817, 0.0
      %820 = vst.msk [vmem:[#allocation3] sm:$0xff] %vm806, %v818
      %821 = vst.msk [vmem:[#allocation3 + $0x8] sm:$0xff] %vm806, %v819
    $region21: #{tpu_custom_call.1} parent=1 // pred_fallthru
      _
    // Predicated region
    $region22: #{tpu_custom_call.1} parent=1 // pred_check
      _
    $region23: #{tpu_custom_call.1} parent=1 // pred_check_branch
      %823 = sbr.rel (0) target = $region25
    $region24: #{tpu_custom_call.1} parent=1 // pred_region
      %825 = vsyncadd [#allocation4], 0
      %s826 = sshll.u32 [#allocation3], 4
      %s827 = int_to_ptr.vmem [resolvable:$true] %s826
      %s828 = sshll.u32 %s3, 4
      %s829 = int_to_ptr.hbm [resolvable:$true] %s828
      %834 = dma.vmem_to_hbm [thread:$0]  %s827, 256, %s829, [#allocation4], 128, 128, 8
    $region25: #{tpu_custom_call.1} parent=1 // pred_fallthru
      _
    // Predicated region
    $region26: #{tpu_custom_call.1} parent=1 // pred_check
      _
    $region27: #{tpu_custom_call.1} parent=1 // pred_check_branch
      %836 = sbr.rel (0) target = $region29
    $region28: #{tpu_custom_call.1} parent=1 // pred_region
      %838 = dma.done [#allocation4], 256
    $region29: #{tpu_custom_call.1} parent=1 // pred_fallthru
      _
    %839 = vsyncpa [#allocation4], 1

</llo_original>
